<compile_context>
chip_gen: v7x
topology: tpu7x:2x2x1
jax: 0.10.0
libtpu: 0.0.40
codegen_flags: <defaults>
</compile_context>

<pallas_src>
import functools

import jax
import jax.numpy as jnp
from jax.experimental import pallas as pl
from jax.experimental.pallas import tpu as pltpu

BN_EPS = 1e-5
_LANE = 128
_MAX_TILE_N = 128 * 1024        # cap on batch-tile width (columns)
_NUM_STAT_PARTIALS = 2          # pass-1 partial accumulators (one per TC on v7x)


@functools.lru_cache(maxsize=None)
def _vmem_budget_bytes():
    """Scoped-VMEM budget: half the physical per-core VMEM (2x headroom)."""
    try:
        cap = int(pltpu.get_tpu_info().vmem_capacity_bytes)
    except Exception:
        cap = 64 * 1024 * 1024  # v7x per-TensorCore physical VMEM (smallest gen)
    return max(cap // 2, 16 * 1024 * 1024)


def _quad_form(w_ref, xt):
    """q[0, n] = x_n^T C1 x_n for every column n of xt, on the VPU only.

    w_ref is an SMEM (1, k(k+1)/2) vector of pair coefficients of the
    symmetrized C1 (w_ii = C1[i,i]; w_ij = C1[i,j] + C1[j,i] for i<j), so the
    contraction is k(k+1)/2 scalar-splat FMAs on (1, tn) rows -- no C1-column
    broadcasts, no MXU.
    """
    k = xt.shape[0]
    q = None
    p = 0
    for i in range(k):
        xi = xt[i:i + 1, :]
        for j in range(i, k):
            xj = xi if j == i else xt[j:j + 1, :]
            term = w_ref[0, p] * (xi * xj)
            q = term if q is None else q + term
            p += 1
    return q                                              # (1, tn)


def _fused_kernel(w_ref, c3_ref, c2_ref, xt_ref, o_ref, *, n_valid):
    """Single-call path: whole transposed batch resident in VMEM.

    Exact centered variance; zero-padded columns contribute z == C3 exactly
    and are corrected analytically (no mask).
    """
    xt = xt_ref[...]                                      # (k, n_pad)
    c3 = c3_ref[0, 0]
    n_pad = xt.shape[1]
    n_extra = n_pad - n_valid
    inv_n = 1.0 / float(n_valid)

    z = _quad_form(w_ref, xt) + c2_ref[...] * xt + c3     # (k, n_pad)

    zsum = jnp.sum(z, axis=1, keepdims=True)              # (k, 1) lane reduce
    if n_extra:
        zsum = zsum - float(n_extra) * c3
    mean = zsum * inv_n
    zc = z - mean
    sq = jnp.sum(zc * zc, axis=1, keepdims=True)          # (k, 1)
    if n_extra:
        pad_d = c3 - mean
        sq = sq - float(n_extra) * pad_d * pad_d
    var = sq * inv_n
    o_ref[...] = zc * jax.lax.rsqrt(var + BN_EPS)


def _stats_kernel(w_ref, c2_ref, bias_ref, xt_ref, sum_ref, sq_ref):
    """Pass 1: per-feature sum(d) / sum(d*d) with d = z - shift.

    Grid = (partials, tiles); each partial owns its own (1, k, 1) accumulator
    block so the leading "parallel" axis can be split across TensorCores.
    bias_ref holds (C3 - shift); padded columns are accumulated unmasked and
    removed analytically in the wrapper.
    """
    i = pl.program_id(1)
    xt = xt_ref[...]                                      # (k, tn)
    d = _quad_form(w_ref, xt) + c2_ref[...] * xt + bias_ref[...]

    @pl.when(i == 0)
    def _():
        sum_ref[...] = jnp.zeros_like(sum_ref)
        sq_ref[...] = jnp.zeros_like(sq_ref)

    k = xt.shape[0]
    sum_ref[...] += jnp.sum(d, axis=1, keepdims=True).reshape(1, k, 1)
    sq_ref[...] += jnp.sum(d * d, axis=1, keepdims=True).reshape(1, k, 1)


def _normalize_kernel(w_ref, c2_ref, biasm_ref, rstd_ref, xt_ref, o_ref):
    """Pass 2: recompute z for the tile and apply the precomputed BN affine.

    o = (z - mean) * rstd = (q + C2*x + (C3 - mean)) * rstd; mean/rstd arrive
    as per-feature (k, 1) vectors, so the body is recompute + one affine and
    an unmasked lane-dense store.
    """
    xt = xt_ref[...]                                      # (k, tn)
    z_shifted = _quad_form(w_ref, xt) + c2_ref[...] * xt + biasm_ref[...]
    o_ref[...] = z_shifted * rstd_ref[...]


def quadratic_model_forward(x, c1, c2, c3, *, force_two_pass=False, tile_n=None):
    """x: (N, k) f32; c1: (k, k); c2: (k,); c3: scalar-like. Returns (N, k)."""
    x = jnp.asarray(x, jnp.float32)
    n, k = x.shape
    c1 = jnp.asarray(c1, jnp.float32).reshape(k, k)
    c2v = jnp.asarray(c2, jnp.float32).reshape(k)
    c3s = jnp.asarray(c3, jnp.float32).reshape(())

    c2_col = c2v.reshape(k, 1)
    c3_2d = c3s.reshape(1, 1)

    # Symmetrized pair coefficients of C1 (upper triangle, off-diagonals doubled).
    pair_w = []
    for i in range(k):
        for j in range(i, k):
            pair_w.append(c1[i, i] if i == j else c1[i, j] + c1[j, i])
    w = jnp.stack(pair_w).reshape(1, len(pair_w))          # (1, k(k+1)/2) f32

    budget = _vmem_budget_bytes()
    n128 = pl.cdiv(n, _LANE) * _LANE
    xt_bytes = k * n128 * 4
    smem = pltpu.MemorySpace.SMEM

    # ---- Fused single-call path: whole transposed batch resident in VMEM ----
    if not force_two_pass and xt_bytes * 10 <= budget:
        xt = jnp.pad(x.T, ((0, 0), (0, n128 - n)))         # (k, n128) lane-dense
        w_spec = pl.BlockSpec((1, w.shape[1]), lambda i: (0, 0), memory_space=smem)
        c3_spec = pl.BlockSpec((1, 1), lambda i: (0, 0), memory_space=smem)
        c2_spec = pl.BlockSpec((k, 1), lambda i: (0, 0))
        xt_spec = pl.BlockSpec((k, n128), lambda i: (0, 0))
        out_t = pl.pallas_call(
            functools.partial(_fused_kernel, n_valid=n),
            grid=(1,),
            in_specs=[w_spec, c3_spec, c2_spec, xt_spec],
            out_specs=xt_spec,
            out_shape=jax.ShapeDtypeStruct((k, n128), jnp.float32),
            compiler_params=pltpu.CompilerParams(vmem_limit_bytes=budget),
        )(w, c3_2d, c2_col, xt)
        return out_t[:, :n].T

    # ---- Two-pass path for batches too large to hold in VMEM ----
    if tile_n is None:
        tn = (budget // 16) // (k * 4)                     # per-buffer byte target
        tn = max(_LANE, min(_MAX_TILE_N, (tn // _LANE) * _LANE))
    else:
        tn = max(_LANE, (int(tile_n) // _LANE) * _LANE)

    num_tiles = pl.cdiv(n, tn)
    parts = _NUM_STAT_PARTIALS
    tiles_per_part = pl.cdiv(num_tiles, parts)
    n_total = parts * tiles_per_part * tn
    n_extra = n_total - n

    xt = jnp.pad(x.T, ((0, 0), (0, n_total - n)))          # (k, n_total)

    # Per-feature shift = z of sample 0 (tiny (k,)-sized wrapper compute) so
    # the accumulated d = z - shift is centered -> no sum/sumsq cancellation.
    x0 = x[0]
    shift = jnp.dot(x0, jnp.dot(c1, x0)) + c2v * x0 + c3s  # (k,)
    shift_col = shift.reshape(k, 1)
    dpad_col = (c3s - shift).reshape(k, 1)                 # d of a zero-padded column

    # Pass 1: partial per-feature sum(d) / sum(d*d), one partial per TC.
    w_spec2 = pl.BlockSpec((1, w.shape[1]), lambda c, i: (0, 0), memory_space=smem)
    vec_spec2 = pl.BlockSpec((k, 1), lambda c, i: (0, 0))
    xt_spec2 = pl.BlockSpec((k, tn), lambda c, i: (0, c * tiles_per_part + i))
    stat_spec = pl.BlockSpec((1, k, 1), lambda c, i: (c, 0, 0))

    psum, psq = pl.pallas_call(
        _stats_kernel,
        grid=(parts, tiles_per_part),
        in_specs=[w_spec2, vec_spec2, vec_spec2, xt_spec2],
        out_specs=[stat_spec, stat_spec],
        out_shape=[jax.ShapeDtypeStruct((parts, k, 1), jnp.float32)] * 2,
        compiler_params=pltpu.CompilerParams(
            dimension_semantics=("parallel", "arbitrary"),
            vmem_limit_bytes=budget),
    )(w, c2_col, dpad_col, xt)

    # Combine partials + analytically remove zero-padded columns (tiny (k,1) math).
    sum_d = jnp.sum(psum, axis=0) - n_extra * dpad_col     # (k, 1)
    sq_d = jnp.sum(psq, axis=0) - n_extra * dpad_col * dpad_col
    mean_d = sum_d / n
    mean = shift_col + mean_d
    var = jnp.maximum(sq_d / n - mean_d * mean_d, 0.0)
    rstd_col = jax.lax.rsqrt(var + BN_EPS)                 # (k, 1)
    biasm_col = c3s - mean                                 # (k, 1): C3 - mean

    # Pass 2: recompute z per tile and apply the affine (independent tiles).
    w_spec1 = pl.BlockSpec((1, w.shape[1]), lambda i: (0, 0), memory_space=smem)
    vec_spec1 = pl.BlockSpec((k, 1), lambda i: (0, 0))
    xt_spec1 = pl.BlockSpec((k, tn), lambda i: (0, i))

    out_t = pl.pallas_call(
        _normalize_kernel,
        grid=(n_total // tn,),
        in_specs=[w_spec1, vec_spec1, vec_spec1, vec_spec1, xt_spec1],
        out_specs=xt_spec1,
        out_shape=jax.ShapeDtypeStruct((k, n_total), jnp.float32),
        compiler_params=pltpu.CompilerParams(
            dimension_semantics=("parallel",),
            vmem_limit_bytes=budget),
    )(w, c2_col, biasm_col, rstd_col, xt)

    return out_t[:, :n].T


def _reference(x, c1, c2, c3):
    q = jnp.sum((x @ c1) * x, axis=1, keepdims=True)       # diag(X C1 X^T)
    z = q + c2 * x + c3
    mean = jnp.mean(z, axis=0, keepdims=True)
    var = jnp.mean((z - mean) ** 2, axis=0, keepdims=True)
    return (z - mean) / jnp.sqrt(var + BN_EPS)


if __name__ == "__main__":
    key = jax.random.PRNGKey(0)
    k1, k2, k3, k4 = jax.random.split(key, 4)
    k = 4

    # Case 1: module default init (C1 = eye, C2 = ones, C3 = 0), tiny batch.
    # Exercises the fused single-call VMEM-resident path.
    c1 = jnp.eye(k, dtype=jnp.float32)
    c2 = jnp.ones((k,), dtype=jnp.float32)
    c3 = jnp.zeros((1,), dtype=jnp.float32)
    x = jax.random.normal(k1, (8, k), dtype=jnp.float32)

    out = jax.block_until_ready(quadratic_model_forward(x, c1, c2, c3))
    ref = _reference(x, c1, c2, c3)
    assert out.shape == (8, k)
    assert jnp.allclose(out, ref, atol=1e-4, rtol=1e-4)

    # Case 2: general parameters; force the gridded two-pass path with small
    # tiles to exercise the partial-sum split, shifted accumulation, and the
    # analytic padded-column correction.
    c1b = 0.3 * jax.random.normal(k2, (k, k), dtype=jnp.float32)
    c2b = jax.random.normal(k3, (k,), dtype=jnp.float32)
    c3b = jnp.array([0.7], dtype=jnp.float32)
    x2 = jax.random.normal(k4, (640, k), dtype=jnp.float32)

    out2 = jax.block_until_ready(
        quadratic_model_forward(x2, c1b, c2b, c3b,
                                force_two_pass=True, tile_n=128))
    ref2 = _reference(x2, c1b, c2b, c3b)
    assert out2.shape == (640, k)
    assert jnp.allclose(out2, ref2, atol=1e-4, rtol=1e-4)

    print("KERNEL_OK")
</pallas_src>

<mosaic_0001>
module attributes {stable_mosaic.version = 11 : i64} {
  func.func @_fused_kernel(%arg0: i32, %arg1: memref<1x10xf32, #tpu.memory_space<smem>>, %arg2: memref<1x1xf32, #tpu.memory_space<smem>>, %arg3: memref<4x1xf32, #tpu.memory_space<vmem>>, %arg4: memref<4x128xf32, #tpu.memory_space<vmem>>, %arg5: memref<4x128xf32, #tpu.memory_space<vmem>>) attributes {dimension_semantics = [#tpu.dimension_semantics<arbitrary>], iteration_bounds = array<i64: 1>, scalar_prefetch = 0 : i64, scratch_operands = 0 : i64, tpu.core_type = #tpu.core_type<tc>, window_params = [{transform_indices = @transform_0, window_bounds = array<i64: 1, 10>}, {transform_indices = @transform_1, window_bounds = array<i64: 1, 1>}, {pipeline_mode = #tpu.pipeline_mode<synchronous>, transform_indices = @transform_2, window_bounds = array<i64: 4, 1>}, {pipeline_mode = #tpu.pipeline_mode<synchronous>, transform_indices = @transform_3, window_bounds = array<i64: 4, 128>}, {pipeline_mode = #tpu.pipeline_mode<synchronous>, transform_indices = @transform_4, window_bounds = array<i64: 4, 128>}]} {
    %c0 = arith.constant 0 : index
    %c0_0 = arith.constant 0 : index
    %0 = vector.load %arg4[%c0, %c0_0] : memref<4x128xf32, #tpu.memory_space<vmem>>, vector<4x128xf32>
    %c0_1 = arith.constant 0 : index
    %c0_2 = arith.constant 0 : index
    %1 = memref.load %arg2[%c0_1, %c0_2] : memref<1x1xf32, #tpu.memory_space<smem>>
    %2 = vector.extract_strided_slice %0 {offsets = [0, 0], sizes = [1, 128], strides = [1, 1]} : vector<4x128xf32> to vector<1x128xf32>
    %c0_3 = arith.constant 0 : index
    %c0_4 = arith.constant 0 : index
    %3 = memref.load %arg1[%c0_3, %c0_4] : memref<1x10xf32, #tpu.memory_space<smem>>
    %4 = arith.mulf %2, %2 : vector<1x128xf32>
    %5 = vector.broadcast %3 : f32 to vector<1x128xf32>
    %6 = arith.mulf %5, %4 : vector<1x128xf32>
    %7 = vector.extract_strided_slice %0 {offsets = [1, 0], sizes = [1, 128], strides = [1, 1]} : vector<4x128xf32> to vector<1x128xf32>
    %c0_5 = arith.constant 0 : index
    %c1 = arith.constant 1 : index
    %8 = memref.load %arg1[%c0_5, %c1] : memref<1x10xf32, #tpu.memory_space<smem>>
    %9 = arith.mulf %2, %7 : vector<1x128xf32>
    %10 = vector.broadcast %8 : f32 to vector<1x128xf32>
    %11 = arith.mulf %10, %9 : vector<1x128xf32>
    %12 = arith.addf %6, %11 : vector<1x128xf32>
    %13 = vector.extract_strided_slice %0 {offsets = [2, 0], sizes = [1, 128], strides = [1, 1]} : vector<4x128xf32> to vector<1x128xf32>
    %c0_6 = arith.constant 0 : index
    %c2 = arith.constant 2 : index
    %14 = memref.load %arg1[%c0_6, %c2] : memref<1x10xf32, #tpu.memory_space<smem>>
    %15 = arith.mulf %2, %13 : vector<1x128xf32>
    %16 = vector.broadcast %14 : f32 to vector<1x128xf32>
    %17 = arith.mulf %16, %15 : vector<1x128xf32>
    %18 = arith.addf %12, %17 : vector<1x128xf32>
    %19 = vector.extract_strided_slice %0 {offsets = [3, 0], sizes = [1, 128], strides = [1, 1]} : vector<4x128xf32> to vector<1x128xf32>
    %c0_7 = arith.constant 0 : index
    %c3 = arith.constant 3 : index
    %20 = memref.load %arg1[%c0_7, %c3] : memref<1x10xf32, #tpu.memory_space<smem>>
    %21 = arith.mulf %2, %19 : vector<1x128xf32>
    %22 = vector.broadcast %20 : f32 to vector<1x128xf32>
    %23 = arith.mulf %22, %21 : vector<1x128xf32>
    %24 = arith.addf %18, %23 : vector<1x128xf32>
    %25 = vector.extract_strided_slice %0 {offsets = [1, 0], sizes = [1, 128], strides = [1, 1]} : vector<4x128xf32> to vector<1x128xf32>
    %c0_8 = arith.constant 0 : index
    %c4 = arith.constant 4 : index
    %26 = memref.load %arg1[%c0_8, %c4] : memref<1x10xf32, #tpu.memory_space<smem>>
    %27 = arith.mulf %25, %25 : vector<1x128xf32>
    %28 = vector.broadcast %26 : f32 to vector<1x128xf32>
    %29 = arith.mulf %28, %27 : vector<1x128xf32>
    %30 = arith.addf %24, %29 : vector<1x128xf32>
    %31 = vector.extract_strided_slice %0 {offsets = [2, 0], sizes = [1, 128], strides = [1, 1]} : vector<4x128xf32> to vector<1x128xf32>
    %c0_9 = arith.constant 0 : index
    %c5 = arith.constant 5 : index
    %32 = memref.load %arg1[%c0_9, %c5] : memref<1x10xf32, #tpu.memory_space<smem>>
    %33 = arith.mulf %25, %31 : vector<1x128xf32>
    %34 = vector.broadcast %32 : f32 to vector<1x128xf32>
    %35 = arith.mulf %34, %33 : vector<1x128xf32>
    %36 = arith.addf %30, %35 : vector<1x128xf32>
    %37 = vector.extract_strided_slice %0 {offsets = [3, 0], sizes = [1, 128], strides = [1, 1]} : vector<4x128xf32> to vector<1x128xf32>
    %c0_10 = arith.constant 0 : index
    %c6 = arith.constant 6 : index
    %38 = memref.load %arg1[%c0_10, %c6] : memref<1x10xf32, #tpu.memory_space<smem>>
    %39 = arith.mulf %25, %37 : vector<1x128xf32>
    %40 = vector.broadcast %38 : f32 to vector<1x128xf32>
    %41 = arith.mulf %40, %39 : vector<1x128xf32>
    %42 = arith.addf %36, %41 : vector<1x128xf32>
    %43 = vector.extract_strided_slice %0 {offsets = [2, 0], sizes = [1, 128], strides = [1, 1]} : vector<4x128xf32> to vector<1x128xf32>
    %c0_11 = arith.constant 0 : index
    %c7 = arith.constant 7 : index
    %44 = memref.load %arg1[%c0_11, %c7] : memref<1x10xf32, #tpu.memory_space<smem>>
    %45 = arith.mulf %43, %43 : vector<1x128xf32>
    %46 = vector.broadcast %44 : f32 to vector<1x128xf32>
    %47 = arith.mulf %46, %45 : vector<1x128xf32>
    %48 = arith.addf %42, %47 : vector<1x128xf32>
    %49 = vector.extract_strided_slice %0 {offsets = [3, 0], sizes = [1, 128], strides = [1, 1]} : vector<4x128xf32> to vector<1x128xf32>
    %c0_12 = arith.constant 0 : index
    %c8 = arith.constant 8 : index
    %50 = memref.load %arg1[%c0_12, %c8] : memref<1x10xf32, #tpu.memory_space<smem>>
    %51 = arith.mulf %43, %49 : vector<1x128xf32>
    %52 = vector.broadcast %50 : f32 to vector<1x128xf32>
    %53 = arith.mulf %52, %51 : vector<1x128xf32>
    %54 = arith.addf %48, %53 : vector<1x128xf32>
    %55 = vector.extract_strided_slice %0 {offsets = [3, 0], sizes = [1, 128], strides = [1, 1]} : vector<4x128xf32> to vector<1x128xf32>
    %c0_13 = arith.constant 0 : index
    %c9 = arith.constant 9 : index
    %56 = memref.load %arg1[%c0_13, %c9] : memref<1x10xf32, #tpu.memory_space<smem>>
    %57 = arith.mulf %55, %55 : vector<1x128xf32>
    %58 = vector.broadcast %56 : f32 to vector<1x128xf32>
    %59 = arith.mulf %58, %57 : vector<1x128xf32>
    %60 = arith.addf %54, %59 : vector<1x128xf32>
    %c0_14 = arith.constant 0 : index
    %c0_15 = arith.constant 0 : index
    %61 = vector.load %arg3[%c0_14, %c0_15] : memref<4x1xf32, #tpu.memory_space<vmem>>, vector<4x1xf32>
    %62 = vector.broadcast %61 : vector<4x1xf32> to vector<4x128xf32>
    %63 = arith.mulf %62, %0 : vector<4x128xf32>
    %64 = vector.broadcast %60 : vector<1x128xf32> to vector<4x128xf32>
    %65 = arith.addf %64, %63 : vector<4x128xf32>
    %66 = vector.broadcast %1 : f32 to vector<4x128xf32>
    %67 = arith.addf %65, %66 : vector<4x128xf32>
    %cst = arith.constant dense<0.000000e+00> : vector<4xf32>
    %68 = vector.multi_reduction <add>, %67, %cst [1] : vector<4x128xf32> to vector<4xf32>
    %69 = vector.shape_cast %68 : vector<4xf32> to vector<4x1xf32>
    %cst_16 = arith.constant 1.200000e+02 : f32
    %70 = arith.mulf %cst_16, %1 : f32
    %71 = vector.broadcast %70 : f32 to vector<4x1xf32>
    %72 = arith.subf %69, %71 : vector<4x1xf32>
    %cst_17 = arith.constant 1.250000e-01 : f32
    %73 = vector.broadcast %cst_17 : f32 to vector<4x1xf32>
    %74 = arith.mulf %72, %73 : vector<4x1xf32>
    %75 = vector.broadcast %74 : vector<4x1xf32> to vector<4x128xf32>
    %76 = arith.subf %67, %75 : vector<4x128xf32>
    %77 = arith.mulf %76, %76 : vector<4x128xf32>
    %cst_18 = arith.constant dense<0.000000e+00> : vector<4xf32>
    %78 = vector.multi_reduction <add>, %77, %cst_18 [1] : vector<4x128xf32> to vector<4xf32>
    %79 = vector.shape_cast %78 : vector<4xf32> to vector<4x1xf32>
    %80 = vector.broadcast %1 : f32 to vector<4x1xf32>
    %81 = arith.subf %80, %74 : vector<4x1xf32>
    %cst_19 = arith.constant 1.200000e+02 : f32
    %82 = vector.broadcast %cst_19 : f32 to vector<4x1xf32>
    %83 = arith.mulf %82, %81 : vector<4x1xf32>
    %84 = arith.mulf %83, %81 : vector<4x1xf32>
    %85 = arith.subf %79, %84 : vector<4x1xf32>
    %cst_20 = arith.constant 1.250000e-01 : f32
    %86 = vector.broadcast %cst_20 : f32 to vector<4x1xf32>
    %87 = arith.mulf %85, %86 : vector<4x1xf32>
    %cst_21 = arith.constant 9.99999974E-6 : f32
    %88 = vector.broadcast %cst_21 : f32 to vector<4x1xf32>
    %89 = arith.addf %87, %88 : vector<4x1xf32>
    %90 = math.rsqrt %89 : vector<4x1xf32>
    %91 = vector.broadcast %90 : vector<4x1xf32> to vector<4x128xf32>
    %92 = arith.mulf %76, %91 : vector<4x128xf32>
    %c0_22 = arith.constant 0 : index
    %c0_23 = arith.constant 0 : index
    %93 = vector.load %arg5[%c0_22, %c0_23] : memref<4x128xf32, #tpu.memory_space<vmem>>, vector<4x128xf32>
    tpu.vector_store %arg5[%c0_22, %c0_23], %92 {strides = array<i32>} : memref<4x128xf32, #tpu.memory_space<vmem>>, vector<4x128xf32>,
    return
  }
  func.func @transform_0(%arg0: i32) -> (i32, i32) {
    %c0_i32 = arith.constant 0 : i32
    %c0_i32_0 = arith.constant 0 : i32
    %c0_i32_1 = arith.constant 0 : i32
    return %c0_i32, %c0_i32_0 : i32, i32
  }
  func.func @transform_1(%arg0: i32) -> (i32, i32) {
    %c0_i32 = arith.constant 0 : i32
    %c0_i32_0 = arith.constant 0 : i32
    %c0_i32_1 = arith.constant 0 : i32
    return %c0_i32, %c0_i32_0 : i32, i32
  }
  func.func @transform_2(%arg0: i32) -> (i32, i32) {
    %c0_i32 = arith.constant 0 : i32
    %c0_i32_0 = arith.constant 0 : i32
    %c0_i32_1 = arith.constant 0 : i32
    return %c0_i32, %c0_i32_0 : i32, i32
  }
  func.func @transform_3(%arg0: i32) -> (i32, i32) {
    %c0_i32 = arith.constant 0 : i32
    %c0_i32_0 = arith.constant 0 : i32
    %c0_i32_1 = arith.constant 0 : i32
    return %c0_i32, %c0_i32_0 : i32, i32
  }
  func.func @transform_4(%arg0: i32) -> (i32, i32) {
    %c0_i32 = arith.constant 0 : i32
    %c0_i32_0 = arith.constant 0 : i32
    %c0_i32_1 = arith.constant 0 : i32
    return %c0_i32, %c0_i32_0 : i32, i32
  }
}

</mosaic_0001>

<llo_original>
// kernel: tpu_custom_call.1
$region0: #{tpu_custom_call.1}
  #allocation0 [shape = 'u32[]', space=smem, size = 0x4, offset = 0x4, fixed_abs, tag = 'smem constant byte address 0x4 - core index']
  #allocation1 [shape = 'u32[144,128]{1,0:T(1,128)}', space=vmem, size = 0x12000, scoped, tag = 'internal scratch']
  #allocation2 [shape = 'f32[1,1]{1,0:T(1,128)S(6)}', space=smem, size = 0x200, scoped, tag = 'scoped memory for tpu_custom_call.1']
  %s0 = inlined_call_operand.vmem [shape: f32[1,10], index: 0, kind: input, shape index: {}]
  %s1 = inlined_call_operand.<no memory space> [shape: f32[1,1], index: 1, kind: input, shape index: {}]
  %s2 = inlined_call_operand.vmem [shape: f32[4,1], index: 2, kind: input, shape index: {}]
  %s3 = inlined_call_operand.vmem [shape: f32[4,128], index: 3, kind: input, shape index: {}]
  %s4 = inlined_call_operand.hbm [shape: f32[4,128], index: 4, kind: output, shape index: {}]
  %s5 = sld [smem:[#allocation0]]
  $region30: #{tpu_custom_call.1} parent=0
    _
  %s7 = ssub.s32 1, %s5
  %s8 = scalar_select 0, %s7, %s5
  %9 = sst [smem:[#allocation2]] %s1
  $region1: #{tpu_custom_call.1} parent=0
    #allocation3 [shape = 'u8[512]{0}', space=smem, size = 0x200, scoped, tag = 'input window, operand 0, single buffered']
    #allocation4 [shape = 's32[1]{0}', space=sflag, size = 0x4, scoped, tag = 'scoped memory for tpu_custom_call.1']
    #allocation5 [shape = 's32[1]{0}', space=sflag, size = 0x4, scoped, tag = 'scoped memory for tpu_custom_call.1']
    #allocation6 [shape = 'u8[2048]{0}', space=vmem, size = 0x800, scoped, tag = 'output window, operand 0, single buffered']
    %10 = vsyncpa [#allocation5], 0
    %11 = vsyncpa [#allocation4], 0
    // Predicated region
    $region2: #{tpu_custom_call.1} parent=1 // pred_check
      _
    $region3: #{tpu_custom_call.1} parent=1 // pred_check_branch
      %13 = sbr.rel (0) target = $region5
    $region4: #{tpu_custom_call.1} parent=1 // pred_region
      %s15 = ssub.s32 16, 16
      %16 = vsyncadd [#allocation5], %s15
      %s18 = sshll.u32 %s0, 4
      %s19 = int_to_ptr.vmem [resolvable:$true] %s18
      %21 = dma.vmem_to_smem %s19, 16, [#allocation3], [#allocation5]
    $region5: #{tpu_custom_call.1} parent=1 // pred_fallthru
      _
    // Predicated region
    $region6: #{tpu_custom_call.1} parent=1 // pred_check
      _
    $region7: #{tpu_custom_call.1} parent=1 // pred_check_branch
      %23 = sbr.rel (0) target = $region9
    $region8: #{tpu_custom_call.1} parent=1 // pred_region
      _
    $region9: #{tpu_custom_call.1} parent=1 // pred_fallthru
      _
    // Predicated region
    $region10: #{tpu_custom_call.1} parent=1 // pred_check
      _
    $region11: #{tpu_custom_call.1} parent=1 // pred_check_branch
      %25 = sbr.rel (0) target = $region13
    $region12: #{tpu_custom_call.1} parent=1 // pred_region
      _
    $region13: #{tpu_custom_call.1} parent=1 // pred_fallthru
      _
    // Predicated region
    $region14: #{tpu_custom_call.1} parent=1 // pred_check
      _
    $region15: #{tpu_custom_call.1} parent=1 // pred_check_branch
      %27 = sbr.rel (0) target = $region17
    $region16: #{tpu_custom_call.1} parent=1 // pred_region
      _
    $region17: #{tpu_custom_call.1} parent=1 // pred_fallthru
      _
    // Predicated region
    $region18: #{tpu_custom_call.1} parent=1 // pred_check
      _
    $region19: #{tpu_custom_call.1} parent=1 // pred_check_branch
      %29 = sbr.rel (0) target = $region21
    $region20: #{tpu_custom_call.1} parent=1 // pred_region
      %30 = dma.done [#allocation5], 16
    $region21: #{tpu_custom_call.1} parent=1 // pred_fallthru
      _
    %31 = sfence
    %v32 = vld [vmem:[%s3] sm:$0xf]
    %s33 = sld [smem:[#allocation2]]
    %s34 = sld [smem:[#allocation3]]
    %v35 = vmul.f32 %v32, %v32
    %v36 = vstv %s34
    %v37 = vmul.f32 %v36, %v35
    %s38 = sld [smem:[#allocation3 + $0x1]]
    %v40 = vrot.slane %v32, 1
    %v42 = vmul.f32 %v32, %v40
    %v43 = vstv %s38
    %v44 = vmul.f32 %v43, %v42
    %v45 = vadd.f32 %v37, %v44
    %s46 = sld [smem:[#allocation3 + $0x2]]
    %v47 = vrot.slane %v32, 2
    %v49 = vmul.f32 %v32, %v47
    %v50 = vstv %s46
    %v51 = vmul.f32 %v50, %v49
    %v52 = vadd.f32 %v45, %v51
    %s53 = sld [smem:[#allocation3 + $0x3]]
    %v54 = vrot.slane %v32, 3
    %v56 = vmul.f32 %v32, %v54
    %v57 = vstv %s53
    %v58 = vmul.f32 %v57, %v56
    %v59 = vadd.f32 %v52, %v58
    %s60 = sld [smem:[#allocation3 + $0x4]]
    %v61 = vstv %s60
    %v62 = vmul.f32 %v61, %v35
    %v64 = vrot.slane %v62, 1
    %v66 = vadd.f32 %v59, %v64
    %s67 = sld [smem:[#allocation3 + $0x5]]
    %v68 = vstv %s67
    %v69 = vmul.f32 %v68, %v42
    %v71 = vrot.slane %v69, 1
    %v73 = vadd.f32 %v66, %v71
    %s74 = sld [smem:[#allocation3 + $0x6]]
    %v75 = vstv %s74
    %v76 = vmul.f32 %v75, %v49
    %v78 = vrot.slane %v76, 1
    %v80 = vadd.f32 %v73, %v78
    %s81 = sld [smem:[#allocation3 + $0x7]]
    %v82 = vstv %s81
    %v83 = vmul.f32 %v82, %v35
    %v85 = vrot.slane %v83, 2
    %v87 = vadd.f32 %v80, %v85
    %s88 = sld [smem:[#allocation3 + $0x8]]
    %v89 = vstv %s88
    %v90 = vmul.f32 %v89, %v42
    %v92 = vrot.slane %v90, 2
    %v94 = vadd.f32 %v87, %v92
    %s95 = sld [smem:[#allocation3 + $0x9]]
    %v96 = vstv %s95
    %v97 = vmul.f32 %v96, %v35
    %v99 = vrot.slane %v97, 3
    %v101 = vadd.f32 %v94, %v99
    %v102 = vld [vmem:[%s2] sm:$0xf]
    %104 = vset.pattern.permute.xlu0 0
    %105 = vperm.xlu0 %104, %v102
    %v106 = vpop.permute.xlu0 %105
    %v108 = vmul.f32 %v106, %v32
    %v109 = vlaneseq
    %v110 = vshrl.u32 %v109, 7
    %v111 = vsub.s32 0, %v110
    %v112 = vrot.slane %v101, %v111
    %v113 = vadd.f32 %v112, %v108
    %v114 = vstv %s33
    %v115 = vadd.f32 %v113, %v114
    %vm116 = vcmask 1043456
    %v117 = vsel %vm116, %v115, 0.0
    %118 = vadd.xlane.f32.xlu0 %v117
    %v119 = vpop.xlane.xlu0 %118
    %s120 = smul.f32 %s33, 120.0
    %v121 = vstv %s120
    %v122 = vsub.f32 %v119, %v121
    %v123 = vmul.f32 %v122, 0.125
    %v124 = vsub.f32 %v115, %v123
    %v125 = vmul.f32 %v124, %v124
    %v126 = vsel %vm116, %v125, 0.0
    %127 = vadd.xlane.f32.xlu0 %v126
    %v128 = vpop.xlane.xlu0 %127
    %v129 = vsub.f32 %v114, %v123
    %v130 = vmul.f32 %v129, 120.0
    %v131 = vmul.f32 %v130, %v129
    %v132 = vsub.f32 %v128, %v131
    %v133 = vmul.f32 %v132, 0.125
    %v134 = vadd.f32 %v133, 1e-05
    %v135 = vrsqrt.pop %v134
    %v136 = vmul.f32 %v124, %v135
    %137 = vst [vmem:[#allocation6] sm:$0xf] %v136
    // Predicated region
    $region22: #{tpu_custom_call.1} parent=1 // pred_check
      _
    $region23: #{tpu_custom_call.1} parent=1 // pred_check_branch
      %139 = sbr.rel (0) target = $region25
    $region24: #{tpu_custom_call.1} parent=1 // pred_region
      %s141 = ssub.s32 64, 64
      %142 = vsyncadd [#allocation4], %s141
      %s144 = sshll.u32 [#allocation6], 4
      %s145 = int_to_ptr.vmem [resolvable:$true] %s144
      %147 = dma.vmem_to_hbm [thread:$0]  %s145, 64, %s4, [#allocation4]
    $region25: #{tpu_custom_call.1} parent=1 // pred_fallthru
      _
    // Predicated region
    $region26: #{tpu_custom_call.1} parent=1 // pred_check
      _
    $region27: #{tpu_custom_call.1} parent=1 // pred_check_branch
      %149 = sbr.rel (0) target = $region29
    $region28: #{tpu_custom_call.1} parent=1 // pred_region
      %150 = dma.done [#allocation4], 64
    $region29: #{tpu_custom_call.1} parent=1 // pred_fallthru
      _
    %151 = vsyncpa [#allocation4], 1
    %152 = vsyncpa [#allocation5], 1

</llo_original>
